<compile_context>
chip_gen: v7x
topology: tpu7x:2x2x1
jax: 0.10.0
libtpu: 0.0.40
codegen_flags: <defaults>
</compile_context>

<pallas_src>
import jax
import jax.numpy as jnp
from jax.experimental import pallas as pl
from jax.experimental.pallas import tpu as pltpu

_LANES = 128
_SUBLANES = 8
_DEFAULT_TILE_B = 8192


def _round_up(n: int, m: int) -> int:
    return ((n + m - 1) // m) * m


def _softplus(z):
    # torch.nn.Softplus(beta=1, threshold=20): identity for z > 20; the exp
    # argument is clamped so large z cannot overflow before the select.
    return jnp.where(z > 20.0, z, jnp.log1p(jnp.exp(jnp.minimum(z, 20.0))))


def _make_kernel(num_hidden: int):
    """Kernel over one batch tile; everything is feature-major (batch on lanes)."""

    def kernel(xt_ref, *refs):
        o_ref = refs[-1]                      # (1, 1, TILE_B) output block
        p = refs[:-1]                         # wT_1, b_1, ..., wT_out, b_out

        h = xt_ref[...]                       # (in_pad, TILE_B), f32
        for l in range(num_hidden):
            w_ref, b_ref = p[2 * l], p[2 * l + 1]
            # MXU matmul; cast activations to the weight dtype (no-op for f32,
            # bf16 path for v6e/v7x), accumulate in f32.
            h = jnp.dot(w_ref[...], h.astype(w_ref.dtype),
                        preferred_element_type=jnp.float32)   # (H_l, TILE_B)
            h = jnp.maximum(h + b_ref[...], 0.0)              # (H_l,1) bcast

        w_ref, b_ref = p[-2], p[-1]
        # Output layer: (1, H) @ (H, TILE_B) -> lane-dense (1, TILE_B).
        z = jnp.dot(w_ref[...], h.astype(w_ref.dtype),
                    preferred_element_type=jnp.float32)
        z = z + b_ref[...]                                     # (1,1) bcast
        o_ref[0] = _softplus(z).astype(o_ref.dtype)            # lane-dense store

    return kernel


def init_params(key, input_dim, hidden_dims):
    """Deterministic init mirroring torch.nn.Linear (weights stored (in, out))."""
    dims = [input_dim] + list(hidden_dims) + [1]
    params = []
    for i in range(len(dims) - 1):
        fan_in, fan_out = dims[i], dims[i + 1]
        key, kw, kb = jax.random.split(key, 3)
        bound = 1.0 / (fan_in ** 0.5)
        w = jax.random.uniform(kw, (fan_in, fan_out), jnp.float32,
                               minval=-bound, maxval=bound)
        b = jax.random.uniform(kb, (fan_out,), jnp.float32,
                               minval=-bound, maxval=bound)
        params.append((w, b))
    return params


def prepare_params(params, matmul_dtype=jnp.float32):
    """Transpose + zero-pad parameters for the kernel.  Done once, not per call.

    Hidden widths are padded to 128 lanes, input_dim to 8 sublanes.  Weights
    are stored transposed (out, in) because the kernel is feature-major.
    matmul_dtype=jnp.bfloat16 stores weights in bf16 for the native-bf16 MXU
    on v6e/v7x (f32 accumulation kept); biases stay f32.
    """
    n = len(params)
    prepped = []
    for i, (w, b) in enumerate(params):
        fan_in, fan_out = w.shape
        in_pad = _round_up(fan_in, _SUBLANES if i == 0 else _LANES)
        out_pad = 1 if i == n - 1 else _round_up(fan_out, _LANES)
        wt = jnp.zeros((out_pad, in_pad), matmul_dtype)
        wt = wt.at[:fan_out, :fan_in].set(w.T.astype(matmul_dtype))
        bp = jnp.zeros((out_pad, 1), jnp.float32).at[:fan_out, 0].set(b)
        prepped.append((wt, bp))
    return prepped


def lyapunov_forward(x, prepped, *, tile_b=_DEFAULT_TILE_B):
    """x: (B, input_dim) f32 -> V(x): (B, 1) f32."""
    B, in_dim = x.shape
    in_pad = prepped[0][0].shape[1]

    # Batch tile: multiple of 128 (batch is the lane axis).  Large enough to
    # amortize the ~0.35us/grid-step overhead, but shrunk for mid-sized
    # batches so the grid has >= 2 steps (v7x: both TensorCores via
    # dimension_semantics=("parallel",)).
    tile_b = max(_LANES, _round_up(tile_b, _LANES))
    tile = max(_LANES, min(tile_b, _round_up(pl.cdiv(B, 2), _LANES)))
    B_pad = _round_up(B, tile)
    grid = B_pad // tile

    # Feature-major input (in_pad, B_pad); zero pad features and batch.
    xt = jnp.pad(x.astype(jnp.float32),
                 ((0, B_pad - B), (0, in_pad - in_dim))).T

    const = lambda i: (0, 0)          # weights/biases: same block every step
                                      # -> resident in VMEM across the grid
    in_specs = [pl.BlockSpec((in_pad, tile), lambda i: (0, i))]   # x^T streamed
    flat_params = []
    prev = in_pad
    for wt, bp in prepped:
        out_w = wt.shape[0]
        in_specs.append(pl.BlockSpec((out_w, prev), const))       # W^T
        in_specs.append(pl.BlockSpec((out_w, 1), const))          # bias column
        flat_params += [wt, bp]
        prev = out_w

    out = pl.pallas_call(
        _make_kernel(len(prepped) - 1),
        out_shape=jax.ShapeDtypeStruct((grid, 1, tile), jnp.float32),
        grid=(grid,),
        in_specs=in_specs,
        out_specs=pl.BlockSpec((1, 1, tile), lambda i: (i, 0, 0)),
        compiler_params=pltpu.CompilerParams(
            dimension_semantics=("parallel",)),                    # v7x: 2 TCs
    )(xt, *flat_params)

    # (grid, 1, tile) row-major == batch order; free reshape back to (B, 1).
    return out.reshape(B_pad, 1)[:B]


def reference_forward(x, params):
    """Pure-JAX reference of the same forward pass (unpadded params)."""
    h = x
    for i, (w, b) in enumerate(params):
        h = h @ w + b
        if i < len(params) - 1:
            h = jnp.maximum(h, 0.0)
        else:
            h = jnp.where(h > 20.0, h, jnp.log1p(jnp.exp(jnp.minimum(h, 20.0))))
    return h


if __name__ == "__main__":
    input_dim = 4
    hidden_dims = [64, 64]

    key = jax.random.PRNGKey(0)
    key, kx = jax.random.split(key)

    params = init_params(key, input_dim, hidden_dims)
    prepped = prepare_params(params)   # f32; pass matmul_dtype=jnp.bfloat16 for v6e/v7x MXU

    fwd = jax.jit(lyapunov_forward, static_argnames=("tile_b",))

    # Small deterministic check (single grid step, tile = 128).
    x_small = jax.random.normal(kx, (8, input_dim), jnp.float32)
    out = jax.block_until_ready(fwd(x_small, prepped))
    ref = reference_forward(x_small, params)
    assert out.shape == (8, 1)
    assert jnp.allclose(out, ref, atol=1e-5, rtol=1e-5), \
        float(jnp.max(jnp.abs(out - ref)))

    # Larger batch exercising the multi-step pipelined path (grid = 2).
    key, kx2 = jax.random.split(key)
    x_big = jax.random.normal(kx2, (4096, input_dim), jnp.float32)
    out_big = jax.block_until_ready(fwd(x_big, prepped))
    ref_big = reference_forward(x_big, params)
    assert out_big.shape == (4096, 1)
    assert jnp.allclose(out_big, ref_big, atol=1e-5, rtol=1e-5), \
        float(jnp.max(jnp.abs(out_big - ref_big)))

    # TODO(synk): LyapunovNetwork.grad() (per-sample autograd backward loop) is
    # a gradient op, not part of the forward pass; not implemented as a kernel.
    print("KERNEL_OK")
</pallas_src>

<mosaic_0001>
module attributes {stable_mosaic.version = 11 : i64} {
  func.func @kernel(%arg0: i32, %arg1: memref<8x128xf32, #tpu.memory_space<vmem>>, %arg2: memref<128x8xf32, #tpu.memory_space<vmem>>, %arg3: memref<128x1xf32, #tpu.memory_space<vmem>>, %arg4: memref<128x128xf32, #tpu.memory_space<vmem>>, %arg5: memref<128x1xf32, #tpu.memory_space<vmem>>, %arg6: memref<1x128xf32, #tpu.memory_space<vmem>>, %arg7: memref<1x1xf32, #tpu.memory_space<vmem>>, %arg8: memref<1x1x128xf32, #tpu.memory_space<vmem>>) attributes {dimension_semantics = [#tpu.dimension_semantics<parallel>], iteration_bounds = array<i64: 1>, scalar_prefetch = 0 : i64, scratch_operands = 0 : i64, tpu.core_type = #tpu.core_type<tc>, window_params = [{transform_indices = @transform_0, window_bounds = array<i64: 8, 128>}, {pipeline_mode = #tpu.pipeline_mode<synchronous>, transform_indices = @transform_1, window_bounds = array<i64: 128, 8>}, {pipeline_mode = #tpu.pipeline_mode<synchronous>, transform_indices = @transform_2, window_bounds = array<i64: 128, 1>}, {pipeline_mode = #tpu.pipeline_mode<synchronous>, transform_indices = @transform_3, window_bounds = array<i64: 128, 128>}, {pipeline_mode = #tpu.pipeline_mode<synchronous>, transform_indices = @transform_4, window_bounds = array<i64: 128, 1>}, {pipeline_mode = #tpu.pipeline_mode<synchronous>, transform_indices = @transform_5, window_bounds = array<i64: 1, 128>}, {pipeline_mode = #tpu.pipeline_mode<synchronous>, transform_indices = @transform_6, window_bounds = array<i64: 1, 1>}, {transform_indices = @transform_7, window_bounds = array<i64: 1, 1, 128>}]} {
    %c0 = arith.constant 0 : index
    %c0_0 = arith.constant 0 : index
    %0 = vector.load %arg1[%c0, %c0_0] : memref<8x128xf32, #tpu.memory_space<vmem>>, vector<8x128xf32>
    %c0_1 = arith.constant 0 : index
    %c0_2 = arith.constant 0 : index
    %1 = vector.load %arg2[%c0_1, %c0_2] : memref<128x8xf32, #tpu.memory_space<vmem>>, vector<128x8xf32>
    %cst = arith.constant dense<0.000000e+00> : vector<128x128xf32>
    %2 = tpu.matmul %1, %0, %cst {dimension_numbers = #tpu.dot_dimension_numbers<[1], [0], [0], [1], [0, 0, 1, 1], [], []>} : vector<128x8xf32>, vector<8x128xf32>, vector<128x128xf32> -> vector<128x128xf32>
    %c0_3 = arith.constant 0 : index
    %c0_4 = arith.constant 0 : index
    %3 = vector.load %arg3[%c0_3, %c0_4] : memref<128x1xf32, #tpu.memory_space<vmem>>, vector<128x1xf32>
    %4 = vector.broadcast %3 : vector<128x1xf32> to vector<128x128xf32>
    %5 = arith.addf %2, %4 : vector<128x128xf32>
    %cst_5 = arith.constant 0.000000e+00 : f32
    %6 = vector.broadcast %cst_5 : f32 to vector<128x128xf32>
    %7 = arith.maximumf %5, %6 : vector<128x128xf32>
    %c0_6 = arith.constant 0 : index
    %c0_7 = arith.constant 0 : index
    %8 = vector.load %arg4[%c0_6, %c0_7] : memref<128x128xf32, #tpu.memory_space<vmem>>, vector<128x128xf32>
    %cst_8 = arith.constant dense<0.000000e+00> : vector<128x128xf32>
    %9 = tpu.matmul %8, %7, %cst_8 {dimension_numbers = #tpu.dot_dimension_numbers<[1], [0], [0], [1], [0, 0, 1, 1], [], []>} : vector<128x128xf32>, vector<128x128xf32>, vector<128x128xf32> -> vector<128x128xf32>
    %c0_9 = arith.constant 0 : index
    %c0_10 = arith.constant 0 : index
    %10 = vector.load %arg5[%c0_9, %c0_10] : memref<128x1xf32, #tpu.memory_space<vmem>>, vector<128x1xf32>
    %11 = vector.broadcast %10 : vector<128x1xf32> to vector<128x128xf32>
    %12 = arith.addf %9, %11 : vector<128x128xf32>
    %cst_11 = arith.constant 0.000000e+00 : f32
    %13 = vector.broadcast %cst_11 : f32 to vector<128x128xf32>
    %14 = arith.maximumf %12, %13 : vector<128x128xf32>
    %c0_12 = arith.constant 0 : index
    %c0_13 = arith.constant 0 : index
    %15 = vector.load %arg6[%c0_12, %c0_13] : memref<1x128xf32, #tpu.memory_space<vmem>>, vector<1x128xf32>
    %cst_14 = arith.constant dense<0.000000e+00> : vector<1x128xf32>
    %16 = tpu.matmul %15, %14, %cst_14 {dimension_numbers = #tpu.dot_dimension_numbers<[1], [0], [0], [1], [0, 0, 1, 1], [], []>} : vector<1x128xf32>, vector<128x128xf32>, vector<1x128xf32> -> vector<1x128xf32>
    %c0_15 = arith.constant 0 : index
    %c0_16 = arith.constant 0 : index
    %17 = vector.load %arg7[%c0_15, %c0_16] : memref<1x1xf32, #tpu.memory_space<vmem>>, vector<1x1xf32>
    %18 = vector.broadcast %17 : vector<1x1xf32> to vector<1x128xf32>
    %19 = arith.addf %16, %18 : vector<1x128xf32>
    %cst_17 = arith.constant 2.000000e+01 : f32
    %20 = vector.broadcast %cst_17 : f32 to vector<1x128xf32>
    %21 = arith.cmpf ogt, %19, %20 : vector<1x128xf32>
    %cst_18 = arith.constant 2.000000e+01 : f32
    %22 = vector.broadcast %cst_18 : f32 to vector<1x128xf32>
    %23 = arith.minimumf %19, %22 : vector<1x128xf32>
    %24 = math.exp %23 : vector<1x128xf32>
    %25 = math.log1p %24 : vector<1x128xf32>
    %26 = arith.select %21, %19, %25 : vector<1x128xi1>, vector<1x128xf32>
    %c0_19 = arith.constant 0 : index
    %c0_20 = arith.constant 0 : index
    %c0_21 = arith.constant 0 : index
    %27 = vector.load %arg8[%c0_19, %c0_20, %c0_21] : memref<1x1x128xf32, #tpu.memory_space<vmem>>, vector<1x1x128xf32>
    %28 = vector.shape_cast %27 : vector<1x1x128xf32> to vector<1x128xf32>
    %29 = vector.shape_cast %26 : vector<1x128xf32> to vector<1x1x128xf32>
    tpu.vector_store %arg8[%c0_19, %c0_20, %c0_21], %29 {strides = array<i32>} : memref<1x1x128xf32, #tpu.memory_space<vmem>>, vector<1x1x128xf32>,
    return
  }
  func.func @transform_0(%arg0: i32) -> (i32, i32) {
    %c0_i32 = arith.constant 0 : i32
    %c0_i32_0 = arith.constant 0 : i32
    return %c0_i32, %arg0 : i32, i32
  }
  func.func @transform_1(%arg0: i32) -> (i32, i32) {
    %c0_i32 = arith.constant 0 : i32
    %c0_i32_0 = arith.constant 0 : i32
    %c0_i32_1 = arith.constant 0 : i32
    return %c0_i32, %c0_i32_0 : i32, i32
  }
  func.func @transform_2(%arg0: i32) -> (i32, i32) {
    %c0_i32 = arith.constant 0 : i32
    %c0_i32_0 = arith.constant 0 : i32
    %c0_i32_1 = arith.constant 0 : i32
    return %c0_i32, %c0_i32_0 : i32, i32
  }
  func.func @transform_3(%arg0: i32) -> (i32, i32) {
    %c0_i32 = arith.constant 0 : i32
    %c0_i32_0 = arith.constant 0 : i32
    %c0_i32_1 = arith.constant 0 : i32
    return %c0_i32, %c0_i32_0 : i32, i32
  }
  func.func @transform_4(%arg0: i32) -> (i32, i32) {
    %c0_i32 = arith.constant 0 : i32
    %c0_i32_0 = arith.constant 0 : i32
    %c0_i32_1 = arith.constant 0 : i32
    return %c0_i32, %c0_i32_0 : i32, i32
  }
  func.func @transform_5(%arg0: i32) -> (i32, i32) {
    %c0_i32 = arith.constant 0 : i32
    %c0_i32_0 = arith.constant 0 : i32
    %c0_i32_1 = arith.constant 0 : i32
    return %c0_i32, %c0_i32_0 : i32, i32
  }
  func.func @transform_6(%arg0: i32) -> (i32, i32) {
    %c0_i32 = arith.constant 0 : i32
    %c0_i32_0 = arith.constant 0 : i32
    %c0_i32_1 = arith.constant 0 : i32
    return %c0_i32, %c0_i32_0 : i32, i32
  }
  func.func @transform_7(%arg0: i32) -> (i32, i32, i32) {
    %c0_i32 = arith.constant 0 : i32
    %c0_i32_0 = arith.constant 0 : i32
    %c0_i32_1 = arith.constant 0 : i32
    return %arg0, %c0_i32, %c0_i32_0 : i32, i32, i32
  }
}

</mosaic_0001>

<llo_original>
// kernel: lyapunov_forward.1
$region0: #{lyapunov_forward.1}
  #allocation0 [shape = 'u32[]', space=smem, size = 0x4, offset = 0x4, fixed_abs, tag = 'smem constant byte address 0x4 - core index']
  #allocation1 [shape = 'u32[144,128]{1,0:T(1,128)}', space=vmem, size = 0x12000, scoped, tag = 'internal scratch']
  #allocation2 [shape = 'f32[1,1]{1,0:T(1,128)S(1)}', space=vmem, size = 0x200, scoped, tag = 'scoped memory for lyapunov_forward.1']
  %s0 = inlined_call_operand.vmem [shape: f32[8,128], index: 0, kind: input, shape index: {}]
  %s1 = inlined_call_operand.vmem [shape: f32[128,8], index: 1, kind: input, shape index: {}]
  %s2 = inlined_call_operand.vmem [shape: f32[128,1], index: 2, kind: input, shape index: {}]
  %s3 = inlined_call_operand.vmem [shape: f32[128,128], index: 3, kind: input, shape index: {}]
  %s4 = inlined_call_operand.vmem [shape: f32[128,1], index: 4, kind: input, shape index: {}]
  %s5 = inlined_call_operand.vmem [shape: f32[1,128], index: 5, kind: input, shape index: {}]
  %s6 = inlined_call_operand.<no memory space> [shape: f32[1,1], index: 6, kind: input, shape index: {}]
  %s7 = inlined_call_operand.vmem [shape: f32[1,1,128], index: 7, kind: output, shape index: {}]
  %s8 = sld [smem:[#allocation0]]
  $region38: #{lyapunov_forward.1} parent=0
    _
  %s10 = ssub.s32 1, %s8
  %s11 = scalar_select 0, %s10, %s8
  %v12 = vstv %s6
  %13 = vst [vmem:[#allocation2] sm:$0x1] %v12
  // Predicated region
  $region2: #{lyapunov_forward.1} parent=0 // pred_check
    _
  $region3: #{lyapunov_forward.1} parent=0 // pred_check_branch
    %15 = sbr.rel (0) target = $region5
  $region4: #{lyapunov_forward.1} parent=0 // pred_region
    _
  $region5: #{lyapunov_forward.1} parent=0 // pred_fallthru
    _
  // Predicated region
  $region6: #{lyapunov_forward.1} parent=0 // pred_check
    _
  $region7: #{lyapunov_forward.1} parent=0 // pred_check_branch
    %17 = sbr.rel (0) target = $region9
  $region8: #{lyapunov_forward.1} parent=0 // pred_region
    _
  $region9: #{lyapunov_forward.1} parent=0 // pred_fallthru
    _
  // Predicated region
  $region10: #{lyapunov_forward.1} parent=0 // pred_check
    _
  $region11: #{lyapunov_forward.1} parent=0 // pred_check_branch
    %19 = sbr.rel (0) target = $region13
  $region12: #{lyapunov_forward.1} parent=0 // pred_region
    _
  $region13: #{lyapunov_forward.1} parent=0 // pred_fallthru
    _
  // Predicated region
  $region14: #{lyapunov_forward.1} parent=0 // pred_check
    _
  $region15: #{lyapunov_forward.1} parent=0 // pred_check_branch
    %21 = sbr.rel (0) target = $region17
  $region16: #{lyapunov_forward.1} parent=0 // pred_region
    _
  $region17: #{lyapunov_forward.1} parent=0 // pred_fallthru
    _
  // Predicated region
  $region18: #{lyapunov_forward.1} parent=0 // pred_check
    _
  $region19: #{lyapunov_forward.1} parent=0 // pred_check_branch
    %23 = sbr.rel (0) target = $region21
  $region20: #{lyapunov_forward.1} parent=0 // pred_region
    _
  $region21: #{lyapunov_forward.1} parent=0 // pred_fallthru
    _
  // Predicated region
  $region22: #{lyapunov_forward.1} parent=0 // pred_check
    _
  $region23: #{lyapunov_forward.1} parent=0 // pred_check_branch
    %25 = sbr.rel (0) target = $region25
  $region24: #{lyapunov_forward.1} parent=0 // pred_region
    _
  $region25: #{lyapunov_forward.1} parent=0 // pred_fallthru
    _
  // Predicated region
  $region26: #{lyapunov_forward.1} parent=0 // pred_check
    _
  $region27: #{lyapunov_forward.1} parent=0 // pred_check_branch
    %27 = sbr.rel (0) target = $region29
  $region28: #{lyapunov_forward.1} parent=0 // pred_region
    _
  $region29: #{lyapunov_forward.1} parent=0 // pred_fallthru
    _
  %v28 = vld [vmem:[%s0] sm:$0xff]
  %v29 = vld [vmem:[%s1] sm:$0xff]
  %v30 = vld [vmem:[%s1 + $0x8] sm:$0xff]
  %v31 = vld [vmem:[%s1 + $0x10] sm:$0xff]
  %v32 = vld [vmem:[%s1 + $0x18] sm:$0xff]
  %v33 = vld [vmem:[%s1 + $0x20] sm:$0xff]
  %v34 = vld [vmem:[%s1 + $0x28] sm:$0xff]
  %v35 = vld [vmem:[%s1 + $0x30] sm:$0xff]
  %v36 = vld [vmem:[%s1 + $0x38] sm:$0xff]
  %v37 = vld [vmem:[%s1 + $0x40] sm:$0xff]
  %v38 = vld [vmem:[%s1 + $0x48] sm:$0xff]
  %v39 = vld [vmem:[%s1 + $0x50] sm:$0xff]
  %v40 = vld [vmem:[%s1 + $0x58] sm:$0xff]
  %v41 = vld [vmem:[%s1 + $0x60] sm:$0xff]
  %v42 = vld [vmem:[%s1 + $0x68] sm:$0xff]
  %v43 = vld [vmem:[%s1 + $0x70] sm:$0xff]
  %v44 = vld [vmem:[%s1 + $0x78] sm:$0xff]
  %v45 = vld [vmem:[%s2] sm:$0xff]
  %v46 = vld [vmem:[%s2 + $0x8] sm:$0xff]
  %v47 = vld [vmem:[%s2 + $0x10] sm:$0xff]
  %v48 = vld [vmem:[%s2 + $0x18] sm:$0xff]
  %v49 = vld [vmem:[%s2 + $0x20] sm:$0xff]
  %v50 = vld [vmem:[%s2 + $0x28] sm:$0xff]
  %v51 = vld [vmem:[%s2 + $0x30] sm:$0xff]
  %v52 = vld [vmem:[%s2 + $0x38] sm:$0xff]
  %v53 = vld [vmem:[%s2 + $0x40] sm:$0xff]
  %v54 = vld [vmem:[%s2 + $0x48] sm:$0xff]
  %v55 = vld [vmem:[%s2 + $0x50] sm:$0xff]
  %v56 = vld [vmem:[%s2 + $0x58] sm:$0xff]
  %v57 = vld [vmem:[%s2 + $0x60] sm:$0xff]
  %v58 = vld [vmem:[%s2 + $0x68] sm:$0xff]
  %v59 = vld [vmem:[%s2 + $0x70] sm:$0xff]
  %v60 = vld [vmem:[%s2 + $0x78] sm:$0xff]
  %62 = vset.pattern.permute.xlu0 0
  %63 = vperm.xlu0 %62, %v45
  %v64 = vpop.permute.xlu0 %63
  %67 = vset.pattern.permute.xlu0 0
  %68 = vperm.xlu0 %67, %v46
  %v69 = vpop.permute.xlu0 %68
  %72 = vset.pattern.permute.xlu0 0
  %73 = vperm.xlu0 %72, %v47
  %v74 = vpop.permute.xlu0 %73
  %77 = vset.pattern.permute.xlu0 0
  %78 = vperm.xlu0 %77, %v48
  %v79 = vpop.permute.xlu0 %78
  %82 = vset.pattern.permute.xlu0 0
  %83 = vperm.xlu0 %82, %v49
  %v84 = vpop.permute.xlu0 %83
  %87 = vset.pattern.permute.xlu0 0
  %88 = vperm.xlu0 %87, %v50
  %v89 = vpop.permute.xlu0 %88
  %92 = vset.pattern.permute.xlu0 0
  %93 = vperm.xlu0 %92, %v51
  %v94 = vpop.permute.xlu0 %93
  %97 = vset.pattern.permute.xlu0 0
  %98 = vperm.xlu0 %97, %v52
  %v99 = vpop.permute.xlu0 %98
  %102 = vset.pattern.permute.xlu0 0
  %103 = vperm.xlu0 %102, %v53
  %v104 = vpop.permute.xlu0 %103
  %107 = vset.pattern.permute.xlu0 0
  %108 = vperm.xlu0 %107, %v54
  %v109 = vpop.permute.xlu0 %108
  %112 = vset.pattern.permute.xlu0 0
  %113 = vperm.xlu0 %112, %v55
  %v114 = vpop.permute.xlu0 %113
  %117 = vset.pattern.permute.xlu0 0
  %118 = vperm.xlu0 %117, %v56
  %v119 = vpop.permute.xlu0 %118
  %122 = vset.pattern.permute.xlu0 0
  %123 = vperm.xlu0 %122, %v57
  %v124 = vpop.permute.xlu0 %123
  %127 = vset.pattern.permute.xlu0 0
  %128 = vperm.xlu0 %127, %v58
  %v129 = vpop.permute.xlu0 %128
  %132 = vset.pattern.permute.xlu0 0
  %133 = vperm.xlu0 %132, %v59
  %v134 = vpop.permute.xlu0 %133
  %137 = vset.pattern.permute.xlu0 0
  %138 = vperm.xlu0 %137, %v60
  %v139 = vpop.permute.xlu0 %138
  %vm141 = vcmask 64512
  %v143 = vsel %vm141, %v29, 0
  %v146 = vsel %vm141, %v30, 0
  %v149 = vsel %vm141, %v31, 0
  %v152 = vsel %vm141, %v32, 0
  %v155 = vsel %vm141, %v33, 0
  %v158 = vsel %vm141, %v34, 0
  %v161 = vsel %vm141, %v35, 0
  %v164 = vsel %vm141, %v36, 0
  %v167 = vsel %vm141, %v37, 0
  %v170 = vsel %vm141, %v38, 0
  %v173 = vsel %vm141, %v39, 0
  %v176 = vsel %vm141, %v40, 0
  %v179 = vsel %vm141, %v41, 0
  %v182 = vsel %vm141, %v42, 0
  %v185 = vsel %vm141, %v43, 0
  %v188 = vsel %vm141, %v44, 0
  %190 = vmatprep.subr.mxu0 0.0
  %191 = vmatpush1.msra.mxu0 %v28
  %192 = vmatprep.subr.mxu0 0.0
  %193 = vmatpush1.msra.mxu0 0.0
  %194 = vmatprep.subr.mxu0 0.0
  %195 = vmatpush1.msra.mxu0 0.0
  %196 = vmatprep.subr.mxu0 0.0
  %197 = vmatpush1.msra.mxu0 0.0
  %198 = vmatprep.subr.mxu0 0.0
  %199 = vmatpush1.msra.mxu0 0.0
  %200 = vmatprep.subr.mxu0 0.0
  %201 = vmatpush1.msra.mxu0 0.0
  %202 = vmatprep.subr.mxu0 0.0
  %203 = vmatpush1.msra.mxu0 0.0
  %204 = vmatprep.subr.mxu0 0.0
  %205 = vmatpush1.msra.mxu0 0.0
  %206 = vmatprep.subr.mxu0 0.0
  %207 = vmatpush1.msra.mxu0 0.0
  %208 = vmatprep.subr.mxu0 0.0
  %209 = vmatpush1.msra.mxu0 0.0
  %210 = vmatprep.subr.mxu0 0.0
  %211 = vmatpush1.msra.mxu0 0.0
  %212 = vmatprep.subr.mxu0 0.0
  %213 = vmatpush1.msra.mxu0 0.0
  %214 = vmatprep.subr.mxu0 0.0
  %215 = vmatpush1.msra.mxu0 0.0
  %216 = vmatprep.subr.mxu0 0.0
  %217 = vmatpush1.msra.mxu0 0.0
  %218 = vmatprep.subr.mxu0 0.0
  %219 = vmatpush1.msra.mxu0 0.0
  %220 = vmatprep.subr.mxu0 0.0
  %221 = vmatpush1.msra.mxu0 0.0
  %222 = vmatprep.subr.mxu0 0.0
  %223 = vmatpush1.msra.mxu0 0.0
  %224 = vmatprep.subr.mxu0 0.0
  %225 = vmatpush1.msra.mxu0 0.0
  %226 = vmatprep.subr.mxu0 0.0
  %227 = vmatpush1.msra.mxu0 0.0
  %228 = vmatprep.subr.mxu0 0.0
  %229 = vmatpush1.msra.mxu0 0.0
  %230 = vmatprep.subr.mxu0 0.0
  %231 = vmatpush1.msra.mxu0 0.0
  %232 = vmatprep.subr.mxu0 0.0
  %233 = vmatpush1.msra.mxu0 0.0
  %234 = vmatprep.subr.mxu0 0.0
  %235 = vmatpush1.msra.mxu0 0.0
  %236 = vmatprep.subr.mxu0 0.0
  %237 = vmatpush1.msra.mxu0 0.0
  %238 = vmatprep.subr.mxu0 0.0
  %239 = vmatpush1.msra.mxu0 0.0
  %240 = vmatprep.subr.mxu0 0.0
  %241 = vmatpush1.msra.mxu0 0.0
  %242 = vmatprep.subr.mxu0 0.0
  %243 = vmatpush1.msra.mxu0 0.0
  %244 = vmatprep.subr.mxu0 0.0
  %245 = vmatpush1.msra.mxu0 0.0
  %246 = vmatprep.subr.mxu0 0.0
  %247 = vmatpush1.msra.mxu0 0.0
  %248 = vmatprep.subr.mxu0 0.0
  %249 = vmatpush1.msra.mxu0 0.0
  %250 = vmatprep.subr.mxu0 0.0
  %251 = vmatpush1.msra.mxu0 0.0
  %252 = vmatprep.subr.mxu0 0.0
  %253 = vmatpush1.msra.mxu0 0.0
  %254 = vmatprep.mubr.f32.mxu0 0.0
  %255 = vmatmul.mubr.f32.gmra.mrb[0].mxu0 %v143
  %v256 = vpop.f32.mrb[0].mxu0
  %v257 = vadd.f32 %v64, %v256
  %v258 = vpop.f32.mrb[0].mxu0
  %259 = vmatprep.mubr.f32.mxu0 0.0
  %260 = vmatmul.mubr.f32.gmra.mrb[0].mxu0 %v146
  %v261 = vpop.f32.mrb[0].mxu0
  %v262 = vadd.f32 %v69, %v261
  %v263 = vpop.f32.mrb[0].mxu0
  %264 = vmatprep.mubr.f32.mxu0 0.0
  %265 = vmatmul.mubr.f32.gmra.mrb[0].mxu0 %v149
  %v266 = vpop.f32.mrb[0].mxu0
  %v267 = vadd.f32 %v74, %v266
  %v268 = vpop.f32.mrb[0].mxu0
  %269 = vmatprep.mubr.f32.mxu0 0.0
  %270 = vmatmul.mubr.f32.gmra.mrb[0].mxu0 %v152
  %v271 = vpop.f32.mrb[0].mxu0
  %v272 = vadd.f32 %v79, %v271
  %v273 = vpop.f32.mrb[0].mxu0
  %274 = vmatprep.mubr.f32.mxu0 0.0
  %275 = vmatmul.mubr.f32.gmra.mrb[0].mxu0 %v155
  %v276 = vpop.f32.mrb[0].mxu0
  %v277 = vadd.f32 %v84, %v276
  %v278 = vpop.f32.mrb[0].mxu0
  %279 = vmatprep.mubr.f32.mxu0 0.0
  %280 = vmatmul.mubr.f32.gmra.mrb[0].mxu0 %v158
  %v281 = vpop.f32.mrb[0].mxu0
  %v282 = vadd.f32 %v89, %v281
  %v283 = vpop.f32.mrb[0].mxu0
  %284 = vmatprep.mubr.f32.mxu0 0.0
  %285 = vmatmul.mubr.f32.gmra.mrb[0].mxu0 %v161
  %v286 = vpop.f32.mrb[0].mxu0
  %v287 = vadd.f32 %v94, %v286
  %v288 = vpop.f32.mrb[0].mxu0
  %289 = vmatprep.mubr.f32.mxu0 0.0
  %290 = vmatmul.mubr.f32.gmra.mrb[0].mxu0 %v164
  %v291 = vpop.f32.mrb[0].mxu0
  %v292 = vadd.f32 %v99, %v291
  %v293 = vpop.f32.mrb[0].mxu0
  %294 = vmatprep.mubr.f32.mxu0 0.0
  %295 = vmatmul.mubr.f32.gmra.mrb[0].mxu0 %v167
  %v296 = vpop.f32.mrb[0].mxu0
  %v297 = vadd.f32 %v104, %v296
  %v298 = vpop.f32.mrb[0].mxu0
  %299 = vmatprep.mubr.f32.mxu0 0.0
  %300 = vmatmul.mubr.f32.gmra.mrb[0].mxu0 %v170
  %v301 = vpop.f32.mrb[0].mxu0
  %v302 = vadd.f32 %v109, %v301
  %v303 = vpop.f32.mrb[0].mxu0
  %304 = vmatprep.mubr.f32.mxu0 0.0
  %305 = vmatmul.mubr.f32.gmra.mrb[0].mxu0 %v173
  %v306 = vpop.f32.mrb[0].mxu0
  %v307 = vadd.f32 %v114, %v306
  %v308 = vpop.f32.mrb[0].mxu0
  %309 = vmatprep.mubr.f32.mxu0 0.0
  %310 = vmatmul.mubr.f32.gmra.mrb[0].mxu0 %v176
  %v311 = vpop.f32.mrb[0].mxu0
  %v312 = vadd.f32 %v119, %v311
  %v313 = vpop.f32.mrb[0].mxu0
  %314 = vmatprep.mubr.f32.mxu0 0.0
  %315 = vmatmul.mubr.f32.gmra.mrb[0].mxu0 %v179
  %v316 = vpop.f32.mrb[0].mxu0
  %v317 = vadd.f32 %v124, %v316
  %v318 = vpop.f32.mrb[0].mxu0
  %319 = vmatprep.mubr.f32.mxu0 0.0
  %320 = vmatmul.mubr.f32.gmra.mrb[0].mxu0 %v182
  %v321 = vpop.f32.mrb[0].mxu0
  %v322 = vadd.f32 %v129, %v321
  %v323 = vpop.f32.mrb[0].mxu0
  %324 = vmatprep.mubr.f32.mxu0 0.0
  %325 = vmatmul.mubr.f32.gmra.mrb[0].mxu0 %v185
  %v326 = vpop.f32.mrb[0].mxu0
  %v327 = vadd.f32 %v134, %v326
  %v328 = vpop.f32.mrb[0].mxu0
  %329 = vmatprep.mubr.f32.mxu0 0.0
  %330 = vmatmul.mubr.f32.gmra.mrb[0].mxu0 %v188
  %v331 = vpop.f32.mrb[0].mxu0
  %v332 = vadd.f32 %v139, %v331
  %v333 = vpop.f32.mrb[0].mxu0
  %334 = vdwg.mxu0
  %v335 = vmax.f32 %v257, 0.0
  %v336 = vmax.f32 %v262, 0.0
  %v337 = vmax.f32 %v267, 0.0
  %v338 = vmax.f32 %v272, 0.0
  %v339 = vmax.f32 %v277, 0.0
  %v340 = vmax.f32 %v282, 0.0
  %v341 = vmax.f32 %v287, 0.0
  %v342 = vmax.f32 %v292, 0.0
  %v343 = vmax.f32 %v297, 0.0
  %v344 = vmax.f32 %v302, 0.0
  %v345 = vmax.f32 %v307, 0.0
  %v346 = vmax.f32 %v312, 0.0
  %v347 = vmax.f32 %v317, 0.0
  %v348 = vmax.f32 %v322, 0.0
  %v349 = vmax.f32 %v327, 0.0
  %v350 = vmax.f32 %v332, 0.0
  %v351 = vld [vmem:[%s3] sm:$0xff]
  %v352 = vld [vmem:[%s3 + $0x8] sm:$0xff]
  %v353 = vld [vmem:[%s3 + $0x10] sm:$0xff]
  %v354 = vld [vmem:[%s3 + $0x18] sm:$0xff]
  %v355 = vld [vmem:[%s3 + $0x20] sm:$0xff]
  %v356 = vld [vmem:[%s3 + $0x28] sm:$0xff]
  %v357 = vld [vmem:[%s3 + $0x30] sm:$0xff]
  %v358 = vld [vmem:[%s3 + $0x38] sm:$0xff]
  %v359 = vld [vmem:[%s3 + $0x40] sm:$0xff]
  %v360 = vld [vmem:[%s3 + $0x48] sm:$0xff]
  %v361 = vld [vmem:[%s3 + $0x50] sm:$0xff]
  %v362 = vld [vmem:[%s3 + $0x58] sm:$0xff]
  %v363 = vld [vmem:[%s3 + $0x60] sm:$0xff]
  %v364 = vld [vmem:[%s3 + $0x68] sm:$0xff]
  %v365 = vld [vmem:[%s3 + $0x70] sm:$0xff]
  %v366 = vld [vmem:[%s3 + $0x78] sm:$0xff]
  %v367 = vld [vmem:[%s4] sm:$0xff]
  %v368 = vld [vmem:[%s4 + $0x8] sm:$0xff]
  %v369 = vld [vmem:[%s4 + $0x10] sm:$0xff]
  %v370 = vld [vmem:[%s4 + $0x18] sm:$0xff]
  %v371 = vld [vmem:[%s4 + $0x20] sm:$0xff]
  %v372 = vld [vmem:[%s4 + $0x28] sm:$0xff]
  %v373 = vld [vmem:[%s4 + $0x30] sm:$0xff]
  %v374 = vld [vmem:[%s4 + $0x38] sm:$0xff]
  %v375 = vld [vmem:[%s4 + $0x40] sm:$0xff]
  %v376 = vld [vmem:[%s4 + $0x48] sm:$0xff]
  %v377 = vld [vmem:[%s4 + $0x50] sm:$0xff]
  %v378 = vld [vmem:[%s4 + $0x58] sm:$0xff]
  %v379 = vld [vmem:[%s4 + $0x60] sm:$0xff]
  %v380 = vld [vmem:[%s4 + $0x68] sm:$0xff]
  %v381 = vld [vmem:[%s4 + $0x70] sm:$0xff]
  %v382 = vld [vmem:[%s4 + $0x78] sm:$0xff]
  %384 = vset.pattern.permute.xlu0 0
  %385 = vperm.xlu0 %384, %v367
  %v386 = vpop.permute.xlu0 %385
  %389 = vset.pattern.permute.xlu0 0
  %390 = vperm.xlu0 %389, %v368
  %v391 = vpop.permute.xlu0 %390
  %394 = vset.pattern.permute.xlu0 0
  %395 = vperm.xlu0 %394, %v369
  %v396 = vpop.permute.xlu0 %395
  %399 = vset.pattern.permute.xlu0 0
  %400 = vperm.xlu0 %399, %v370
  %v401 = vpop.permute.xlu0 %400
  %404 = vset.pattern.permute.xlu0 0
  %405 = vperm.xlu0 %404, %v371
  %v406 = vpop.permute.xlu0 %405
  %409 = vset.pattern.permute.xlu0 0
  %410 = vperm.xlu0 %409, %v372
  %v411 = vpop.permute.xlu0 %410
  %414 = vset.pattern.permute.xlu0 0
  %415 = vperm.xlu0 %414, %v373
  %v416 = vpop.permute.xlu0 %415
  %419 = vset.pattern.permute.xlu0 0
  %420 = vperm.xlu0 %419, %v374
  %v421 = vpop.permute.xlu0 %420
  %424 = vset.pattern.permute.xlu0 0
  %425 = vperm.xlu0 %424, %v375
  %v426 = vpop.permute.xlu0 %425
  %429 = vset.pattern.permute.xlu0 0
  %430 = vperm.xlu0 %429, %v376
  %v431 = vpop.permute.xlu0 %430
  %434 = vset.pattern.permute.xlu0 0
  %435 = vperm.xlu0 %434, %v377
  %v436 = vpop.permute.xlu0 %435
  %439 = vset.pattern.permute.xlu0 0
  %440 = vperm.xlu0 %439, %v378
  %v441 = vpop.permute.xlu0 %440
  %444 = vset.pattern.permute.xlu0 0
  %445 = vperm.xlu0 %444, %v379
  %v446 = vpop.permute.xlu0 %445
  %449 = vset.pattern.permute.xlu0 0
  %450 = vperm.xlu0 %449, %v380
  %v451 = vpop.permute.xlu0 %450
  %454 = vset.pattern.permute.xlu0 0
  %455 = vperm.xlu0 %454, %v381
  %v456 = vpop.permute.xlu0 %455
  %459 = vset.pattern.permute.xlu0 0
  %460 = vperm.xlu0 %459, %v382
  %v461 = vpop.permute.xlu0 %460
  %463 = vmatprep.subr.mxu0 0.0
  %464 = vmatpush1.msra.mxu0 %v335
  %465 = vmatprep.subr.mxu0 0.0
  %466 = vmatpush1.msra.mxu0 %v336
  %467 = vmatprep.subr.mxu0 0.0
  %468 = vmatpush1.msra.mxu0 %v337
  %469 = vmatprep.subr.mxu0 0.0
  %470 = vmatpush1.msra.mxu0 %v338
  %471 = vmatprep.subr.mxu0 0.0
  %472 = vmatpush1.msra.mxu0 %v339
  %473 = vmatprep.subr.mxu0 0.0
  %474 = vmatpush1.msra.mxu0 %v340
  %475 = vmatprep.subr.mxu0 0.0
  %476 = vmatpush1.msra.mxu0 %v341
  %477 = vmatprep.subr.mxu0 0.0
  %478 = vmatpush1.msra.mxu0 %v342
  %479 = vmatprep.subr.mxu0 0.0
  %480 = vmatpush1.msra.mxu0 %v343
  %481 = vmatprep.subr.mxu0 0.0
  %482 = vmatpush1.msra.mxu0 %v344
  %483 = vmatprep.subr.mxu0 0.0
  %484 = vmatpush1.msra.mxu0 %v345
  %485 = vmatprep.subr.mxu0 0.0
  %486 = vmatpush1.msra.mxu0 %v346
  %487 = vmatprep.subr.mxu0 0.0
  %488 = vmatpush1.msra.mxu0 %v347
  %489 = vmatprep.subr.mxu0 0.0
  %490 = vmatpush1.msra.mxu0 %v348
  %491 = vmatprep.subr.mxu0 0.0
  %492 = vmatpush1.msra.mxu0 %v349
  %493 = vmatprep.subr.mxu0 0.0
  %494 = vmatpush1.msra.mxu0 %v350
  %495 = vmatprep.subr.mxu0 0.0
  %496 = vmatpush1.msra.mxu0 0.0
  %497 = vmatprep.subr.mxu0 0.0
  %498 = vmatpush1.msra.mxu0 0.0
  %499 = vmatprep.subr.mxu0 0.0
  %500 = vmatpush1.msra.mxu0 0.0
  %501 = vmatprep.subr.mxu0 0.0
  %502 = vmatpush1.msra.mxu0 0.0
  %503 = vmatprep.subr.mxu0 0.0
  %504 = vmatpush1.msra.mxu0 0.0
  %505 = vmatprep.subr.mxu0 0.0
  %506 = vmatpush1.msra.mxu0 0.0
  %507 = vmatprep.subr.mxu0 0.0
  %508 = vmatpush1.msra.mxu0 0.0
  %509 = vmatprep.subr.mxu0 0.0
  %510 = vmatpush1.msra.mxu0 0.0
  %511 = vmatprep.subr.mxu0 0.0
  %512 = vmatpush1.msra.mxu0 0.0
  %513 = vmatprep.subr.mxu0 0.0
  %514 = vmatpush1.msra.mxu0 0.0
  %515 = vmatprep.subr.mxu0 0.0
  %516 = vmatpush1.msra.mxu0 0.0
  %517 = vmatprep.subr.mxu0 0.0
  %518 = vmatpush1.msra.mxu0 0.0
  %519 = vmatprep.subr.mxu0 0.0
  %520 = vmatpush1.msra.mxu0 0.0
  %521 = vmatprep.subr.mxu0 0.0
  %522 = vmatpush1.msra.mxu0 0.0
  %523 = vmatprep.subr.mxu0 0.0
  %524 = vmatpush1.msra.mxu0 0.0
  %525 = vmatprep.subr.mxu0 0.0
  %526 = vmatpush1.msra.mxu0 0.0
  %527 = vmatprep.mubr.f32.mxu0 0.0
  %528 = vmatmul.mubr.f32.gmra.mrb[0].mxu0 %v351
  %v529 = vpop.f32.mrb[0].mxu0
  %v530 = vadd.f32 %v386, %v529
  %v531 = vpop.f32.mrb[0].mxu0
  %532 = vmatprep.mubr.f32.mxu0 0.0
  %533 = vmatmul.mubr.f32.gmra.mrb[0].mxu0 %v352
  %v534 = vpop.f32.mrb[0].mxu0
  %v535 = vadd.f32 %v391, %v534
  %v536 = vpop.f32.mrb[0].mxu0
  %537 = vmatprep.mubr.f32.mxu0 0.0
  %538 = vmatmul.mubr.f32.gmra.mrb[0].mxu0 %v353
  %v539 = vpop.f32.mrb[0].mxu0
  %v540 = vadd.f32 %v396, %v539
  %v541 = vpop.f32.mrb[0].mxu0
  %542 = vmatprep.mubr.f32.mxu0 0.0
  %543 = vmatmul.mubr.f32.gmra.mrb[0].mxu0 %v354
  %v544 = vpop.f32.mrb[0].mxu0
  %v545 = vadd.f32 %v401, %v544
  %v546 = vpop.f32.mrb[0].mxu0
  %547 = vmatprep.mubr.f32.mxu0 0.0
  %548 = vmatmul.mubr.f32.gmra.mrb[0].mxu0 %v355
  %v549 = vpop.f32.mrb[0].mxu0
  %v550 = vadd.f32 %v406, %v549
  %v551 = vpop.f32.mrb[0].mxu0
  %552 = vmatprep.mubr.f32.mxu0 0.0
  %553 = vmatmul.mubr.f32.gmra.mrb[0].mxu0 %v356
  %v554 = vpop.f32.mrb[0].mxu0
  %v555 = vadd.f32 %v411, %v554
  %v556 = vpop.f32.mrb[0].mxu0
  %557 = vmatprep.mubr.f32.mxu0 0.0
  %558 = vmatmul.mubr.f32.gmra.mrb[0].mxu0 %v357
  %v559 = vpop.f32.mrb[0].mxu0
  %v560 = vadd.f32 %v416, %v559
  %v561 = vpop.f32.mrb[0].mxu0
  %562 = vmatprep.mubr.f32.mxu0 0.0
  %563 = vmatmul.mubr.f32.gmra.mrb[0].mxu0 %v358
  %v564 = vpop.f32.mrb[0].mxu0
  %v565 = vadd.f32 %v421, %v564
  %v566 = vpop.f32.mrb[0].mxu0
  %567 = vmatprep.mubr.f32.mxu0 0.0
  %568 = vmatmul.mubr.f32.gmra.mrb[0].mxu0 %v359
  %v569 = vpop.f32.mrb[0].mxu0
  %v570 = vadd.f32 %v426, %v569
  %v571 = vpop.f32.mrb[0].mxu0
  %572 = vmatprep.mubr.f32.mxu0 0.0
  %573 = vmatmul.mubr.f32.gmra.mrb[0].mxu0 %v360
  %v574 = vpop.f32.mrb[0].mxu0
  %v575 = vadd.f32 %v431, %v574
  %v576 = vpop.f32.mrb[0].mxu0
  %577 = vmatprep.mubr.f32.mxu0 0.0
  %578 = vmatmul.mubr.f32.gmra.mrb[0].mxu0 %v361
  %v579 = vpop.f32.mrb[0].mxu0
  %v580 = vadd.f32 %v436, %v579
  %v581 = vpop.f32.mrb[0].mxu0
  %582 = vmatprep.mubr.f32.mxu0 0.0
  %583 = vmatmul.mubr.f32.gmra.mrb[0].mxu0 %v362
  %v584 = vpop.f32.mrb[0].mxu0
  %v585 = vadd.f32 %v441, %v584
  %v586 = vpop.f32.mrb[0].mxu0
  %587 = vmatprep.mubr.f32.mxu0 0.0
  %588 = vmatmul.mubr.f32.gmra.mrb[0].mxu0 %v363
  %v589 = vpop.f32.mrb[0].mxu0
  %v590 = vadd.f32 %v446, %v589
  %v591 = vpop.f32.mrb[0].mxu0
  %592 = vmatprep.mubr.f32.mxu0 0.0
  %593 = vmatmul.mubr.f32.gmra.mrb[0].mxu0 %v364
  %v594 = vpop.f32.mrb[0].mxu0
  %v595 = vadd.f32 %v451, %v594
  %v596 = vpop.f32.mrb[0].mxu0
  %597 = vmatprep.mubr.f32.mxu0 0.0
  %598 = vmatmul.mubr.f32.gmra.mrb[0].mxu0 %v365
  %v599 = vpop.f32.mrb[0].mxu0
  %v600 = vadd.f32 %v456, %v599
  %v601 = vpop.f32.mrb[0].mxu0
  %602 = vmatprep.mubr.f32.mxu0 0.0
  %603 = vmatmul.mubr.f32.gmra.mrb[0].mxu0 %v366
  %v604 = vpop.f32.mrb[0].mxu0
  %v605 = vadd.f32 %v461, %v604
  %v606 = vpop.f32.mrb[0].mxu0
  %607 = vdwg.mxu0
  %v608 = vmax.f32 %v530, 0.0
  %v609 = vmax.f32 %v535, 0.0
  %v610 = vmax.f32 %v540, 0.0
  %v611 = vmax.f32 %v545, 0.0
  %v612 = vmax.f32 %v550, 0.0
  %v613 = vmax.f32 %v555, 0.0
  %v614 = vmax.f32 %v560, 0.0
  %v615 = vmax.f32 %v565, 0.0
  %v616 = vmax.f32 %v570, 0.0
  %v617 = vmax.f32 %v575, 0.0
  %v618 = vmax.f32 %v580, 0.0
  %v619 = vmax.f32 %v585, 0.0
  %v620 = vmax.f32 %v590, 0.0
  %v621 = vmax.f32 %v595, 0.0
  %v622 = vmax.f32 %v600, 0.0
  %v623 = vmax.f32 %v605, 0.0
  %v624 = vld [vmem:[%s5] sm:$0x1]
  %v625 = vld [vmem:[#allocation2] sm:$0x1]
  %627 = vset.pattern.permute.xlu0 0
  %628 = vperm.xlu0 %627, %v625
  %v629 = vpop.permute.xlu0 %628
  %v631 = vlaneseq
  %v632 = vshrl.u32 %v631, 7
  %v633 = vsub.s32 0, %v632
  %v634 = vrot.slane %v629, %v633
  %635 = vmatprep.subr.mxu0 0.0
  %636 = vmatpush1.msra.mxu0 %v608
  %637 = vmatprep.subr.mxu0 0.0
  %638 = vmatpush1.msra.mxu0 %v609
  %639 = vmatprep.subr.mxu0 0.0
  %640 = vmatpush1.msra.mxu0 %v610
  %641 = vmatprep.subr.mxu0 0.0
  %642 = vmatpush1.msra.mxu0 %v611
  %643 = vmatprep.subr.mxu0 0.0
  %644 = vmatpush1.msra.mxu0 %v612
  %645 = vmatprep.subr.mxu0 0.0
  %646 = vmatpush1.msra.mxu0 %v613
  %647 = vmatprep.subr.mxu0 0.0
  %648 = vmatpush1.msra.mxu0 %v614
  %649 = vmatprep.subr.mxu0 0.0
  %650 = vmatpush1.msra.mxu0 %v615
  %651 = vmatprep.subr.mxu0 0.0
  %652 = vmatpush1.msra.mxu0 %v616
  %653 = vmatprep.subr.mxu0 0.0
  %654 = vmatpush1.msra.mxu0 %v617
  %655 = vmatprep.subr.mxu0 0.0
  %656 = vmatpush1.msra.mxu0 %v618
  %657 = vmatprep.subr.mxu0 0.0
  %658 = vmatpush1.msra.mxu0 %v619
  %659 = vmatprep.subr.mxu0 0.0
  %660 = vmatpush1.msra.mxu0 %v620
  %661 = vmatprep.subr.mxu0 0.0
  %662 = vmatpush1.msra.mxu0 %v621
  %663 = vmatprep.subr.mxu0 0.0
  %664 = vmatpush1.msra.mxu0 %v622
  %665 = vmatprep.subr.mxu0 0.0
  %666 = vmatpush1.msra.mxu0 %v623
  %667 = vmatprep.subr.mxu0 0.0
  %668 = vmatpush1.msra.mxu0 0.0
  %669 = vmatprep.subr.mxu0 0.0
  %670 = vmatpush1.msra.mxu0 0.0
  %671 = vmatprep.subr.mxu0 0.0
  %672 = vmatpush1.msra.mxu0 0.0
  %673 = vmatprep.subr.mxu0 0.0
  %674 = vmatpush1.msra.mxu0 0.0
  %675 = vmatprep.subr.mxu0 0.0
  %676 = vmatpush1.msra.mxu0 0.0
  %677 = vmatprep.subr.mxu0 0.0
  %678 = vmatpush1.msra.mxu0 0.0
  %679 = vmatprep.subr.mxu0 0.0
  %680 = vmatpush1.msra.mxu0 0.0
  %681 = vmatprep.subr.mxu0 0.0
  %682 = vmatpush1.msra.mxu0 0.0
  %683 = vmatprep.subr.mxu0 0.0
  %684 = vmatpush1.msra.mxu0 0.0
  %685 = vmatprep.subr.mxu0 0.0
  %686 = vmatpush1.msra.mxu0 0.0
  %687 = vmatprep.subr.mxu0 0.0
  %688 = vmatpush1.msra.mxu0 0.0
  %689 = vmatprep.subr.mxu0 0.0
  %690 = vmatpush1.msra.mxu0 0.0
  %691 = vmatprep.subr.mxu0 0.0
  %692 = vmatpush1.msra.mxu0 0.0
  %693 = vmatprep.subr.mxu0 0.0
  %694 = vmatpush1.msra.mxu0 0.0
  %695 = vmatprep.subr.mxu0 0.0
  %696 = vmatpush1.msra.mxu0 0.0
  %697 = vmatprep.subr.mxu0 0.0
  %698 = vmatpush1.msra.mxu0 0.0
  %699 = vmatprep.mubr.f32.mxu0 0.0
  %700 = vmatmul.mubr.f32.gmra.mrb[0].mxu0 %v624
  %v701 = vpop.f32.mrb[0].mxu0
  %v702 = vadd.f32 %v634, %v701
  %v703 = vpop.f32.mrb[0].mxu0
  %704 = vdwg.mxu0
  %vm705 = vcmp.gt.f32.partialorder %v702, 20.0
  %v706 = vmin.f32 %v702, 20.0
  %v707 = vmul.f32 %v706, 1.442695
  %v708 = vpow.pop %v707
  %v709 = vadd.f32 %v708, 1.0
  %v710 = vlog2.pop %v709
  %v711 = vmul.f32 %v710, 0.6931472
  %v712 = vmul.f32 -0.5, %v708
  %v713 = vadd.f32 %v712, 1.0
  %v714 = vmul.f32 %v713, %v708
  %v715 = vand.u32 2147483647, %v708
  %vm716 = vcmp.lt.f32.partialorder %v715, 0.0004427343
  %v717 = vsel %vm716, %v714, %v711
  %v718 = vsel %vm705, %v702, %v717
  %719 = vst [vmem:[%s7] sm:$0x1] %v718
  // Predicated region
  $region30: #{lyapunov_forward.1} parent=0 // pred_check
    _
  $region31: #{lyapunov_forward.1} parent=0 // pred_check_branch
    %721 = sbr.rel (0) target = $region33
  $region32: #{lyapunov_forward.1} parent=0 // pred_region
    _
  $region33: #{lyapunov_forward.1} parent=0 // pred_fallthru
    _
  // Predicated region
  $region34: #{lyapunov_forward.1} parent=0 // pred_check
    _
  $region35: #{lyapunov_forward.1} parent=0 // pred_check_branch
    %723 = sbr.rel (0) target = $region37
  $region36: #{lyapunov_forward.1} parent=0 // pred_region
    _
  $region37: #{lyapunov_forward.1} parent=0 // pred_fallthru
    _

</llo_original>
